<compile_context>
chip_gen: v6e
topology: v6e:2x2x1
jax: 0.10.0
libtpu: 0.0.40
codegen_flags: <defaults>
</compile_context>

<pallas_src>
import functools

import jax
import jax.numpy as jnp
from jax.experimental import pallas as pl
from jax.experimental.pallas import tpu as pltpu


def _round_up(x, m):
    return (x + m - 1) // m * m


def _vmem_capacity_bytes():
    try:
        return int(pltpu.get_tpu_info().vmem_capacity_bytes)
    except Exception:
        return 64 * 1024 * 1024  # conservative (v7x-sized) fallback


def _bf16_tanh_ok():
    # v6e / v7x EUP has a bf16 path; v5e and older do not.
    try:
        kind = jax.devices()[0].device_kind.lower()
    except Exception:
        return False
    return not any(t in kind for t in ("v2", "v3", "v4", "v5"))


def _buffered_spec(block_shape, index_map, depth):
    try:
        return pl.BlockSpec(block_shape, index_map, pipeline_mode=pl.Buffered(depth))
    except (TypeError, AttributeError):
        return pl.BlockSpec(block_shape, index_map)


# --------------- Pass A: per-metapath sums of tanh(z @ W1 + b1) ---------------
def _scores_kernel(z_ref, w1_ref, b1_ref, acc_ref, *, n_valid, inner_steps,
                   tanh_dtype):
    c = pl.program_id(0)   # TensorCore-split index ("parallel")
    j = pl.program_id(1)   # reduction over node tiles ("arbitrary")

    @pl.when(j == 0)
    def _():
        acc_ref[...] = jnp.zeros_like(acc_ref)

    z = z_ref[...]                                              # (rows, M*D)
    rows = z.shape[0]
    pre = jnp.dot(z, w1_ref[...], preferred_element_type=jnp.float32)
    pre = pre + b1_ref[...]                                     # (rows, M*H) f32
    h = jnp.tanh(pre.astype(tanh_dtype)).astype(jnp.float32)

    base = (c * inner_steps + j) * rows
    is_partial = base + rows > n_valid

    @pl.when(jnp.logical_not(is_partial))
    def _():
        acc_ref[...] += jnp.sum(h, axis=0, keepdims=True)

    @pl.when(is_partial)
    def _():
        # Ragged tail / clamped duplicate tile: NaN-safe select, then reduce.
        r = jax.lax.broadcasted_iota(jnp.int32, (rows, 1), 0)
        hm = jnp.where(base + r < n_valid, h, 0.0)
        acc_ref[...] += jnp.sum(hm, axis=0, keepdims=True)


# ------------------- Pass B: out = sum_m beta[m] * z[:, m, :] -----------------
def _mix_kernel(z_ref, s_ref, o_ref):
    o_ref[...] = jnp.dot(z_ref[...], s_ref[...],
                         preferred_element_type=jnp.float32).astype(o_ref.dtype)


def semantic_attention(z, w1, b1, w2, *, tile_rows=None):
    """z: (N, M, D), w1: (D, H), b1: (1, H) or (H,), w2: (H, 1) or (H,)."""
    N, M, D = z.shape
    H = w1.shape[1]
    MD, MH = M * D, M * H

    # Keep z in its native dtype (bf16 fast path); weights follow.
    compute_dtype = jnp.bfloat16 if z.dtype == jnp.bfloat16 else jnp.float32
    z = z.astype(compute_dtype)
    w1 = jnp.asarray(w1, jnp.float32)
    b1 = jnp.asarray(b1, jnp.float32).reshape(1, H)
    w2 = jnp.asarray(w2, jnp.float32).reshape(H, 1)
    tanh_dtype = (jnp.bfloat16
                  if (compute_dtype == jnp.bfloat16 and _bf16_tanh_ok())
                  else jnp.float32)
    itemsize = jnp.dtype(compute_dtype).itemsize

    # Lane-dense block-diagonal first Linear and tiled bias.
    w1_bd = jnp.kron(jnp.eye(M, dtype=jnp.float32), w1).astype(compute_dtype)  # (MD, MH)
    b1_t = jnp.tile(b1, (1, M))                                                # (1, MH) f32
    z_wide = z.reshape(N, MD)                                                  # free view

    # ----------------------------- VMEM / tiling -----------------------------
    vmem_cap = _vmem_capacity_bytes()
    vmem_limit = max(vmem_cap // 2,
                     min((vmem_cap * 3) // 4, vmem_cap - (24 << 20)))
    tile_budget = vmem_limit // 2
    cap_rows = _round_up(N, 8)

    md_pad = _round_up(MD, 128)
    mh_pad = _round_up(MH, 128)
    d_pad = _round_up(D, 128)

    if tile_rows is None:
        # Per-node-row bytes with 128-lane padding accounted for.
        bytes_a = 2 * md_pad * itemsize + 3 * mh_pad * 4            # 2x z bufs + f32 temps
        bytes_b = 3 * md_pad * itemsize + d_pad * 4 + 2 * d_pad * itemsize
        tn_a = (tile_budget // max(bytes_a, 1)) // 8 * 8
        tn_b = (tile_budget // max(bytes_b, 1)) // 8 * 8
        # Cap so each core sees >= ~8 pipeline steps.
        step_cap = _round_up(pl.cdiv(N, 16), 8)
        tn_a = max(8, min(tn_a, step_cap, cap_rows))
        tn_b = max(8, min(tn_b, step_cap, cap_rows))
    else:
        tn_a = tn_b = max(8, min(_round_up(tile_rows, 8), cap_rows))

    # -------------------------------- Pass A --------------------------------
    n_blocks = pl.cdiv(N, tn_a)
    split = 2                            # unconditional 2-way TC split (v7x)
    inner = pl.cdiv(n_blocks, split)
    last_block = n_blocks - 1

    def z_map_a(c, j, inner=inner, last=last_block):
        # Clamp so the padded (duplicate) step never issues an OOB block DMA;
        # its rows are fully masked in-kernel.
        return (jnp.minimum(c * inner + j, last), 0)

    cost_a = pl.CostEstimate(
        flops=2 * N * MD * MH,
        transcendentals=N * MH,
        bytes_accessed=N * MD * itemsize + MD * MH * itemsize + split * MH * 4)

    partial = pl.pallas_call(
        functools.partial(_scores_kernel, n_valid=N, inner_steps=inner,
                          tanh_dtype=tanh_dtype),
        out_shape=jax.ShapeDtypeStruct((split, 1, MH), jnp.float32),
        grid_spec=pltpu.PrefetchScalarGridSpec(
            num_scalar_prefetch=0,
            grid=(split, inner),
            in_specs=[
                pl.BlockSpec((tn_a, MD), z_map_a),
                pl.BlockSpec((MD, MH), lambda c, j: (0, 0)),
                pl.BlockSpec((1, MH), lambda c, j: (0, 0)),
            ],
            out_specs=pl.BlockSpec((None, 1, MH), lambda c, j: (c, 0, 0)),
        ),
        compiler_params=pltpu.CompilerParams(
            dimension_semantics=("parallel", "arbitrary"),
            vmem_limit_bytes=vmem_limit),
        cost_estimate=cost_a,
    )(z_wide, w1_bd, b1_t)

    # Tiny (M, H) epilogue: the bias-free second Linear commutes with the mean
    # over nodes; then softmax over the M metapaths (all f32).
    acc = jnp.sum(partial, axis=0).reshape(M, H)                 # (M, H)
    scores = jnp.sum(acc * w2[:, 0][None, :], axis=1) / N        # (M,)
    beta = jax.nn.softmax(scores)                                # (M,)

    # -------------------------------- Pass B --------------------------------
    # out = z_wide @ S with S[m*D + d, d] = beta[m]  (block-diagonal).
    S = jnp.kron(beta[:, None], jnp.eye(D, dtype=jnp.float32)).astype(compute_dtype)

    cost_b = pl.CostEstimate(
        flops=2 * N * MD * D,
        transcendentals=0,
        bytes_accessed=N * MD * itemsize + MD * D * itemsize + N * D * itemsize)

    out = pl.pallas_call(
        _mix_kernel,
        out_shape=jax.ShapeDtypeStruct((N, D), compute_dtype),
        grid_spec=pltpu.PrefetchScalarGridSpec(
            num_scalar_prefetch=0,
            grid=(pl.cdiv(N, tn_b),),
            in_specs=[
                _buffered_spec((tn_b, MD), lambda i: (i, 0), 3),
                pl.BlockSpec((MD, D), lambda i: (0, 0)),
            ],
            out_specs=pl.BlockSpec((tn_b, D), lambda i: (i, 0)),
        ),
        compiler_params=pltpu.CompilerParams(
            dimension_semantics=("parallel",),
            vmem_limit_bytes=vmem_limit),
        cost_estimate=cost_b,
    )(z_wide, S)
    return out


def _reference(z, w1, b1, w2):
    N, M, D = z.shape
    h = jnp.tanh(z.reshape(N * M, D) @ w1 + b1.reshape(1, -1))   # (N*M, H)
    s = (h @ w2.reshape(-1, 1)).reshape(N, M, 1)                 # (N, M, 1)
    beta = jax.nn.softmax(s.mean(0), axis=0)                     # (M, 1)
    return (beta[None, :, :] * z).sum(1)                         # (N, D)


if __name__ == "__main__":
    M, D, H = 4, 32, 128   # metapaths, in_size, hidden_size (module default)
    key = jax.random.PRNGKey(0)
    kz, k1, kb, k2 = jax.random.split(key, 4)
    w1 = jax.random.normal(k1, (D, H), dtype=jnp.float32) * 0.1
    b1 = jax.random.normal(kb, (1, H), dtype=jnp.float32) * 0.1
    w2 = jax.random.normal(k2, (H, 1), dtype=jnp.float32) * 0.1

    # Case 1: f32 input, N divisible by explicit tile -> exact f32 path,
    #         even block count across the 2-way core split.
    z32 = jax.random.normal(jax.random.fold_in(kz, 16), (16, M, D),
                            dtype=jnp.float32)
    out32 = jax.block_until_ready(semantic_attention(z32, w1, b1, w2,
                                                     tile_rows=8))
    ref32 = _reference(z32, w1, b1, w2)
    assert out32.shape == (16, D)
    assert jnp.allclose(out32, ref32, atol=1e-4, rtol=1e-4), "mismatch f32"

    # Case 2: bf16 input, ragged N, auto tiles -> bf16 fast path, ragged-edge
    #         masking, odd block count (clamped duplicate tile on core 1).
    zb = jax.random.normal(jax.random.fold_in(kz, 20), (20, M, D),
                           dtype=jnp.float32).astype(jnp.bfloat16)
    outb = jax.block_until_ready(semantic_attention(zb, w1, b1, w2))
    refb = _reference(zb.astype(jnp.float32), w1, b1, w2)
    assert outb.shape == (20, D)
    assert jnp.allclose(outb.astype(jnp.float32), refb,
                        atol=5e-2, rtol=5e-2), "mismatch bf16"
    print("KERNEL_OK")
</pallas_src>

<mosaic_0001>
module attributes {stable_mosaic.version = 11 : i64} {
  func.func @_scores_kernel(%arg0: i32, %arg1: i32, %arg2: memref<8x128xf32, #tpu.memory_space<vmem>>, %arg3: memref<128x512xf32, #tpu.memory_space<vmem>>, %arg4: memref<1x512xf32, #tpu.memory_space<vmem>>, %arg5: memref<1x1x512xf32, #tpu.memory_space<vmem>>) attributes {dimension_semantics = [#tpu.dimension_semantics<parallel>, #tpu.dimension_semantics<arbitrary>], iteration_bounds = array<i64: 2, 1>, scalar_prefetch = 0 : i64, scratch_operands = 0 : i64, tpu.core_type = #tpu.core_type<tc>, window_params = [{transform_indices = @transform_0, window_bounds = array<i64: 8, 128>}, {pipeline_mode = #tpu.pipeline_mode<synchronous>, transform_indices = @transform_1, window_bounds = array<i64: 128, 512>}, {pipeline_mode = #tpu.pipeline_mode<synchronous>, transform_indices = @transform_2, window_bounds = array<i64: 1, 512>}, {transform_indices = @transform_3, window_bounds = array<i64: 1, 1, 512>}]} {
    %c0_i32 = arith.constant 0 : i32
    %0 = arith.cmpi eq, %arg1, %c0_i32 : i32
    %1 = arith.extui %0 : i1 to i32
    %c0_i32_0 = arith.constant 0 : i32
    %2 = arith.cmpi ne, %1, %c0_i32_0 : i32
    scf.if %2 {
      %cst_9 = arith.constant 0.000000e+00 : f32
      %20 = vector.broadcast %cst_9 : f32 to vector<1x512xf32>
      %c0_10 = arith.constant 0 : index
      %c0_11 = arith.constant 0 : index
      %c0_12 = arith.constant 0 : index
      %21 = vector.load %arg5[%c0_10, %c0_11, %c0_12] : memref<1x1x512xf32, #tpu.memory_space<vmem>>, vector<1x1x512xf32>
      %22 = vector.shape_cast %21 : vector<1x1x512xf32> to vector<1x512xf32>
      %23 = vector.shape_cast %20 : vector<1x512xf32> to vector<1x1x512xf32>
      tpu.vector_store %arg5[%c0_10, %c0_11, %c0_12], %23 {strides = array<i32>} : memref<1x1x512xf32, #tpu.memory_space<vmem>>, vector<1x1x512xf32>,
    } else {
    }
    %c0 = arith.constant 0 : index
    %c0_1 = arith.constant 0 : index
    %3 = vector.load %arg2[%c0, %c0_1] : memref<8x128xf32, #tpu.memory_space<vmem>>, vector<8x128xf32>
    %c0_2 = arith.constant 0 : index
    %c0_3 = arith.constant 0 : index
    %4 = vector.load %arg3[%c0_2, %c0_3] : memref<128x512xf32, #tpu.memory_space<vmem>>, vector<128x512xf32>
    %cst = arith.constant dense<0.000000e+00> : vector<8x512xf32>
    %5 = tpu.matmul %3, %4, %cst {dimension_numbers = #tpu.dot_dimension_numbers<[1], [0], [0], [1], [0, 0, 1, 1], [], []>} : vector<8x128xf32>, vector<128x512xf32>, vector<8x512xf32> -> vector<8x512xf32>
    %c0_4 = arith.constant 0 : index
    %c0_5 = arith.constant 0 : index
    %6 = vector.load %arg4[%c0_4, %c0_5] : memref<1x512xf32, #tpu.memory_space<vmem>>, vector<1x512xf32>
    %7 = vector.broadcast %6 : vector<1x512xf32> to vector<8x512xf32>
    %8 = arith.addf %5, %7 : vector<8x512xf32>
    %9 = math.tanh %8 : vector<8x512xf32>
    %c1_i32 = arith.constant 1 : i32
    %10 = arith.muli %arg0, %c1_i32 : i32
    %11 = arith.addi %10, %arg1 : i32
    %c8_i32 = arith.constant 8 : i32
    %12 = arith.muli %11, %c8_i32 : i32
    %c8_i32_6 = arith.constant 8 : i32
    %13 = arith.addi %12, %c8_i32_6 : i32
    %c16_i32 = arith.constant 16 : i32
    %14 = arith.cmpi sgt, %13, %c16_i32 : i32
    %true = arith.constant true
    %15 = arith.xori %14, %true : i1
    %16 = arith.extui %15 : i1 to i32
    %c0_i32_7 = arith.constant 0 : i32
    %17 = arith.cmpi ne, %16, %c0_i32_7 : i32
    scf.if %17 {
      %c0_9 = arith.constant 0 : index
      %c0_10 = arith.constant 0 : index
      %c0_11 = arith.constant 0 : index
      %20 = vector.load %arg5[%c0_9, %c0_10, %c0_11] : memref<1x1x512xf32, #tpu.memory_space<vmem>>, vector<1x1x512xf32>
      %21 = vector.shape_cast %20 : vector<1x1x512xf32> to vector<1x512xf32>
      %cst_12 = arith.constant dense<0.000000e+00> : vector<512xf32>
      %22 = vector.multi_reduction <add>, %9, %cst_12 [0] : vector<8x512xf32> to vector<512xf32>
      %23 = vector.shape_cast %22 : vector<512xf32> to vector<1x512xf32>
      %24 = arith.addf %21, %23 : vector<1x512xf32>
      %c0_13 = arith.constant 0 : index
      %c0_14 = arith.constant 0 : index
      %c0_15 = arith.constant 0 : index
      %25 = vector.load %arg5[%c0_13, %c0_14, %c0_15] : memref<1x1x512xf32, #tpu.memory_space<vmem>>, vector<1x1x512xf32>
      %26 = vector.shape_cast %25 : vector<1x1x512xf32> to vector<1x512xf32>
      %27 = vector.shape_cast %24 : vector<1x512xf32> to vector<1x1x512xf32>
      tpu.vector_store %arg5[%c0_13, %c0_14, %c0_15], %27 {strides = array<i32>} : memref<1x1x512xf32, #tpu.memory_space<vmem>>, vector<1x1x512xf32>,
    } else {
    }
    %18 = arith.extui %14 : i1 to i32
    %c0_i32_8 = arith.constant 0 : i32
    %19 = arith.cmpi ne, %18, %c0_i32_8 : i32
    scf.if %19 {
      %20 = tpu.iota {dimensions = array<i32: 0>} : vector<8x1xi32>
      %21 = vector.broadcast %12 : i32 to vector<8x1xi32>
      %22 = arith.addi %21, %20 : vector<8x1xi32>
      %c16_i32_9 = arith.constant 16 : i32
      %23 = vector.broadcast %c16_i32_9 : i32 to vector<8x1xi32>
      %24 = arith.cmpi slt, %22, %23 : vector<8x1xi32>
      %cst_10 = arith.constant 0.000000e+00 : f32
      %25 = vector.shape_cast %24 : vector<8x1xi1> to vector<8x1xi1>
      %26 = vector.broadcast %25 : vector<8x1xi1> to vector<8x512xi1>
      %27 = vector.broadcast %cst_10 : f32 to vector<8x512xf32>
      %28 = arith.select %26, %9, %27 : vector<8x512xi1>, vector<8x512xf32>
      %c0_11 = arith.constant 0 : index
      %c0_12 = arith.constant 0 : index
      %c0_13 = arith.constant 0 : index
      %29 = vector.load %arg5[%c0_11, %c0_12, %c0_13] : memref<1x1x512xf32, #tpu.memory_space<vmem>>, vector<1x1x512xf32>
      %30 = vector.shape_cast %29 : vector<1x1x512xf32> to vector<1x512xf32>
      %cst_14 = arith.constant dense<0.000000e+00> : vector<512xf32>
      %31 = vector.multi_reduction <add>, %28, %cst_14 [0] : vector<8x512xf32> to vector<512xf32>
      %32 = vector.shape_cast %31 : vector<512xf32> to vector<1x512xf32>
      %33 = arith.addf %30, %32 : vector<1x512xf32>
      %c0_15 = arith.constant 0 : index
      %c0_16 = arith.constant 0 : index
      %c0_17 = arith.constant 0 : index
      %34 = vector.load %arg5[%c0_15, %c0_16, %c0_17] : memref<1x1x512xf32, #tpu.memory_space<vmem>>, vector<1x1x512xf32>
      %35 = vector.shape_cast %34 : vector<1x1x512xf32> to vector<1x512xf32>
      %36 = vector.shape_cast %33 : vector<1x512xf32> to vector<1x1x512xf32>
      tpu.vector_store %arg5[%c0_15, %c0_16, %c0_17], %36 {strides = array<i32>} : memref<1x1x512xf32, #tpu.memory_space<vmem>>, vector<1x1x512xf32>,
    } else {
    }
    return
  }
  func.func @transform_0(%arg0: i32, %arg1: i32) -> (i32, i32) {
    %c1_i32 = arith.constant 1 : i32
    %0 = arith.muli %arg0, %c1_i32 : i32
    %1 = arith.addi %0, %arg1 : i32
    %c1_i32_0 = arith.constant 1 : i32
    %2 = arith.minsi %1, %c1_i32_0 : i32
    %c0_i32 = arith.constant 0 : i32
    %c0_i32_1 = arith.constant 0 : i32
    return %2, %c0_i32 : i32, i32
  }
  func.func @transform_1(%arg0: i32, %arg1: i32) -> (i32, i32) {
    %c0_i32 = arith.constant 0 : i32
    %c0_i32_0 = arith.constant 0 : i32
    %c0_i32_1 = arith.constant 0 : i32
    return %c0_i32, %c0_i32_0 : i32, i32
  }
  func.func @transform_2(%arg0: i32, %arg1: i32) -> (i32, i32) {
    %c0_i32 = arith.constant 0 : i32
    %c0_i32_0 = arith.constant 0 : i32
    %c0_i32_1 = arith.constant 0 : i32
    return %c0_i32, %c0_i32_0 : i32, i32
  }
  func.func @transform_3(%arg0: i32, %arg1: i32) -> (i32, i32, i32) {
    %c0_i32 = arith.constant 0 : i32
    %c0_i32_0 = arith.constant 0 : i32
    %c0_i32_1 = arith.constant 0 : i32
    return %arg0, %c0_i32, %c0_i32_0 : i32, i32, i32
  }
}

</mosaic_0001>

<llo_original>
// kernel: tpu_custom_call.1
$region0: #{tpu_custom_call.1}
  #allocation0 [shape = 'u32[]', space=smem, size = 0x4, offset = 0x4, fixed_abs, tag = 'smem constant byte address 0x4 - core index']
  #allocation1 [shape = 'u32[144,128]{1,0:T(1,128)}', space=vmem, size = 0x12000, scoped, tag = 'internal scratch']
  %s0 = inlined_call_operand.hbm [shape: f32[16,128], index: 0, kind: input, shape index: {}]
  %s1 = inlined_call_operand.hbm [shape: f32[128,512], index: 1, kind: input, shape index: {}]
  %s2 = inlined_call_operand.hbm [shape: f32[1,512], index: 2, kind: input, shape index: {}]
  %s3 = inlined_call_operand.hbm [shape: f32[2,1,512], index: 3, kind: output, shape index: {}]
  %s4 = sld [smem:[#allocation0]]
  $region69: #{tpu_custom_call.1} parent=0
    _
  %s6 = ssub.s32 1, %s4
  %s7 = scalar_select 0, %s6, %s4
  $region1: #{tpu_custom_call.1} parent=0
    #allocation2 [shape = 'u8[8192]{0}', space=vmem, size = 0x2000, scoped, tag = 'input window, operand 0']
    #allocation3 [shape = 's32[2]{0}', space=sflag, size = 0x8, scoped, tag = 'scoped memory for tpu_custom_call.1']
    #allocation4 [shape = 's32[2]{0}', space=sflag, size = 0x8, scoped, tag = 'scoped memory for tpu_custom_call.1']
    #allocation5 [shape = 'u8[262144]{0}', space=vmem, size = 0x40000, scoped, tag = 'input window, operand 1, single buffered']
    #allocation6 [shape = 's32[1]{0}', space=sflag, size = 0x4, scoped, tag = 'scoped memory for tpu_custom_call.1']
    #allocation7 [shape = 'u8[2048]{0}', space=vmem, size = 0x800, scoped, tag = 'input window, operand 2, single buffered']
    #allocation8 [shape = 'u8[4096]{0}', space=vmem, size = 0x1000, scoped, tag = 'output window, operand 0']
    %8 = vsyncpa [#allocation3], 0
    %s9 = scalar_lea.sflag [#allocation3], 1
    %10 = vsyncpa %s9, 0
    %11 = vsyncpa [#allocation6], 0
    %12 = vsyncpa [#allocation4], 0
    %s13 = scalar_lea.sflag [#allocation4], 1
    %14 = vsyncpa %s13, 0
    loop: start=0, step=1, limit=4
    $region2: #{tpu_custom_call.1} parent=1 // loop_pre_header
      _
    $region3: #{tpu_custom_call.1} parent=1 // loop_header
      %s16 = sphi 0, %s20
      %p17 = scmp.ge.s32.totalorder %s16, 4
      %s23 = sphi 0, %s35
      %s24 = sphi 0, %s31
      %s25 = sphi 0, %s23
      %s26 = sphi 0, %s24
      %s27 = sphi 0, %s25
      %s28 = sphi 0, %s26
      %s44 = sphi 0, %s46
      %s47 = sphi 0, %s44
      %s48 = sphi 0, %s47
      %s64 = sphi 0, %s48
      %s68 = sphi 0, %s68
      %s70 = sphi 0, %s68
      %s71 = sphi 0, %s70
      %s85 = sphi 0, %s71
      %s89 = sphi 0, %s89
      %s91 = sphi 0, %s89
      %s92 = sphi 0, %s91
      %s106 = sphi 0, %s92
      %s112 = sphi 0, %s114
      %s115 = sphi 0, %s112
      %s116 = sphi 0, %s115
      %s132 = sphi 0, %s116
    $region4: #{tpu_custom_call.1} parent=1 // loop_header_branch
      %19 = sbr.rel (%p17) target = $region8
    $region5: #{tpu_custom_call.1} parent=1 // loop_body
      %s21 = ssub.s32 %s16, 1
      %s22 = ssub.s32 %s16, 2
      %s29 = sadd.s32 1, %s24
      %p30 = scmp.ge.s32.totalorder %s29, 1
      %s31 = scalar_select %p30, 0, %s29
      %s32 = sadd.s32 1, %s23
      %s33 = scalar_select %p30, %s32, %s23
      %p34 = scmp.ge.s32.totalorder %s33, 2
      %s35 = scalar_select %p34, 0, %s33
      %s36 = sadd.s32 %s23, %s24
      %p37 = scmp.lt.s32.totalorder %s36, 1
      %s38 = scalar_select %p37, %s36, 1
      %s39 = sadd.s32 %s35, %s31
      %p40 = scmp.lt.s32.totalorder %s39, 1
      %s41 = scalar_select %p40, %s39, 1
      %s42 = ssub.s32 %s38, %s41
      %p43 = scmp.eq.s32.totalorder %s42, 0
      %s45 = sadd.s32 %s44, 1
      %s46 = scalar_select %p43, %s44, %s45
      %p49 = pneg %p43
      %p50 = scmp.eq.s32.totalorder %s16, 1
      %p51 = por %p49, %p50
      %p52 = scmp.ne.s32.totalorder %s44, %s47
      %p53 = scmp.eq.s32.totalorder %s16, 0
      %p54 = por %p52, %p53
      %p55 = scmp.ne.s32.totalorder %s44, %s47
      %p56 = scmp.eq.s32.totalorder %s21, 1
      %p57 = por %p55, %p56
      %p58 = scmp.ne.s32.totalorder %s47, %s48
      %p59 = scmp.eq.s32.totalorder %s21, 0
      %p60 = por %p58, %p59
      %p61 = scmp.ne.s32.totalorder %s47, %s48
      %p62 = scmp.eq.s32.totalorder %s22, 1
      %p63 = por %p61, %p62
      %p65 = scmp.ne.s32.totalorder %s48, %s64
      %p66 = scmp.eq.s32.totalorder %s22, 0
      %p67 = por %p65, %p66
      %s69 = sadd.s32 %s68, 1
      %p72 = scmp.eq.s32.totalorder %s16, 1
      %p73 = scmp.ne.s32.totalorder %s68, %s70
      %p74 = scmp.eq.s32.totalorder %s16, 0
      %p75 = por %p73, %p74
      %p76 = scmp.ne.s32.totalorder %s68, %s70
      %p77 = scmp.eq.s32.totalorder %s21, 1
      %p78 = por %p76, %p77
      %p79 = scmp.ne.s32.totalorder %s70, %s71
      %p80 = scmp.eq.s32.totalorder %s21, 0
      %p81 = por %p79, %p80
      %p82 = scmp.ne.s32.totalorder %s70, %s71
      %p83 = scmp.eq.s32.totalorder %s22, 1
      %p84 = por %p82, %p83
      %p86 = scmp.ne.s32.totalorder %s71, %s85
      %p87 = scmp.eq.s32.totalorder %s22, 0
      %p88 = por %p86, %p87
      %s90 = sadd.s32 %s89, 1
      %p93 = scmp.eq.s32.totalorder %s16, 1
      %p94 = scmp.ne.s32.totalorder %s89, %s91
      %p95 = scmp.eq.s32.totalorder %s16, 0
      %p96 = por %p94, %p95
      %p97 = scmp.ne.s32.totalorder %s89, %s91
      %p98 = scmp.eq.s32.totalorder %s21, 1
      %p99 = por %p97, %p98
      %p100 = scmp.ne.s32.totalorder %s91, %s92
      %p101 = scmp.eq.s32.totalorder %s21, 0
      %p102 = por %p100, %p101
      %p103 = scmp.ne.s32.totalorder %s91, %s92
      %p104 = scmp.eq.s32.totalorder %s22, 1
      %p105 = por %p103, %p104
      %p107 = scmp.ne.s32.totalorder %s92, %s106
      %p108 = scmp.eq.s32.totalorder %s22, 0
      %p109 = por %p107, %p108
      %s110 = ssub.s32 %s23, %s35
      %p111 = scmp.eq.s32.totalorder %s110, 0
      %s113 = sadd.s32 %s112, 1
      %s114 = scalar_select %p111, %s112, %s113
      %p117 = pneg %p111
      %p118 = scmp.eq.s32.totalorder %s16, 1
      %p119 = por %p117, %p118
      %p120 = scmp.ne.s32.totalorder %s112, %s115
      %p121 = scmp.eq.s32.totalorder %s16, 0
      %p122 = por %p120, %p121
      %p123 = scmp.ne.s32.totalorder %s112, %s115
      %p124 = scmp.eq.s32.totalorder %s21, 1
      %p125 = por %p123, %p124
      %p126 = scmp.ne.s32.totalorder %s115, %s116
      %p127 = scmp.eq.s32.totalorder %s21, 0
      %p128 = por %p126, %p127
      %p129 = scmp.ne.s32.totalorder %s115, %s116
      %p130 = scmp.eq.s32.totalorder %s22, 1
      %p131 = por %p129, %p130
      %p133 = scmp.ne.s32.totalorder %s116, %s132
      %p134 = scmp.eq.s32.totalorder %s22, 0
      %p135 = por %p133, %p134
      %p136 = scmp.le.s32.totalorder 1, %s16
      %p137 = scmp.lt.s32.totalorder %s16, 3
      %p138 = pnand %p136, %p137
      %p139 = pneg %p138
      // Predicated region
      $region9: #{tpu_custom_call.1} parent=5 // pred_check
        _
      $region10: #{tpu_custom_call.1} parent=5 // pred_check_branch
        %141 = sbr.rel (%p138) target = $region12
      $region11: #{tpu_custom_call.1} parent=5 // pred_region
        %s142 = ssub.s32 %s16, 1
        // Predicated region
        $region13: #{tpu_custom_call.1} parent=11 // pred_check
          %p143 = pneg %p81
        $region14: #{tpu_custom_call.1} parent=11 // pred_check_branch
          %145 = sbr.rel (%p143) target = $region16
        $region15: #{tpu_custom_call.1} parent=11 // pred_region
          %s147 = ssub.s32 8192, 8192
          %148 = vsyncadd [#allocation6], %s147
          %s149 = sshll.u32 [#allocation5], 4
          %s150 = int_to_ptr.vmem [resolvable:$true] %s149
          %155 = dma.hbm_to_vmem [thread:$0]  %s1, 8192, %s150, [#allocation6], 512, 512, 32
        $region16: #{tpu_custom_call.1} parent=11 // pred_fallthru
          _
        // Predicated region
        $region17: #{tpu_custom_call.1} parent=11 // pred_check
          %p156 = pneg %p102
        $region18: #{tpu_custom_call.1} parent=11 // pred_check_branch
          %158 = sbr.rel (%p156) target = $region20
        $region19: #{tpu_custom_call.1} parent=11 // pred_region
          %s160 = ssub.s32 64, 64
          %161 = vsyncadd [#allocation6], %s160
          %s163 = sshll.u32 [#allocation7], 4
          %s164 = int_to_ptr.vmem [resolvable:$true] %s163
          %166 = dma.hbm_to_vmem [thread:$0]  %s2, 64, %s164, [#allocation6]
        $region20: #{tpu_custom_call.1} parent=11 // pred_fallthru
          _
      $region12: #{tpu_custom_call.1} parent=5 // pred_fallthru
        _
      %p167 = scmp.lt.s32.totalorder %s16, 2
      // Predicated region
      $region21: #{tpu_custom_call.1} parent=5 // pred_check
        %p168 = pneg %p167
      $region22: #{tpu_custom_call.1} parent=5 // pred_check_branch
        %170 = sbr.rel (%p168) target = $region24
      $region23: #{tpu_custom_call.1} parent=5 // pred_region
        // Predicated region
        $region25: #{tpu_custom_call.1} parent=23 // pred_check
          %p171 = pneg %p54
        $region26: #{tpu_custom_call.1} parent=23 // pred_check_branch
          %173 = sbr.rel (%p171) target = $region28
        $region27: #{tpu_custom_call.1} parent=23 // pred_region
          %s174 = sand.u32 %s44, 1
          %s175 = scalar_lea.sflag [#allocation3], %s174
          %s176 = sand.u32 %s44, 1
          %s177 = smul.addr %s176, 8
          %s178 = scalar_lea.vmem [#allocation2], %s177
          %s179 = sadd.s32 %s23, %s24
          %p180 = scmp.lt.s32.totalorder %s179, 1
          %s181 = scalar_select %p180, %s179, 1
          %s183 = ssub.s32 128, 128
          %184 = vsyncadd %s175, %s183
          %s185 = smul.addr %s181, 128
          %s186 = scalar_lea.hbm %s0, %s185
          %s188 = sshll.u32 %s178, 4
          %s189 = int_to_ptr.vmem [resolvable:$true] %s188
          %191 = dma.hbm_to_vmem [thread:$0]  %s186, 128, %s189, %s175
        $region28: #{tpu_custom_call.1} parent=23 // pred_fallthru
          _
      $region24: #{tpu_custom_call.1} parent=5 // pred_fallthru
        _
      %p192 = scmp.le.s32.totalorder 1, %s16
      %p193 = scmp.lt.s32.totalorder %s16, 3
      %p194 = pnand %p192, %p193
      %p195 = pneg %p194
      // Predicated region
      $region29: #{tpu_custom_call.1} parent=5 // pred_check
        _
      $region30: #{tpu_custom_call.1} parent=5 // pred_check_branch
        %197 = sbr.rel (%p194) target = $region32
      $region31: #{tpu_custom_call.1} parent=5 // pred_region
        %s198 = ssub.s32 %s16, 1
        %s199 = sand.u32 %s47, 1
        %s200 = scalar_lea.sflag [#allocation3], %s199
        %s201 = sand.u32 %s47, 1
        %s202 = smul.addr %s201, 8
        %s203 = scalar_lea.vmem [#allocation2], %s202
        // Predicated region
        $region33: #{tpu_custom_call.1} parent=31 // pred_check
          %p204 = pneg %p60
        $region34: #{tpu_custom_call.1} parent=31 // pred_check_branch
          %206 = sbr.rel (%p204) target = $region36
        $region35: #{tpu_custom_call.1} parent=31 // pred_region
          %207 = dma.done %s200, 128
        $region36: #{tpu_custom_call.1} parent=31 // pred_fallthru
          _
        // Predicated region
        $region37: #{tpu_custom_call.1} parent=31 // pred_check
          %p208 = pneg %p81
        $region38: #{tpu_custom_call.1} parent=31 // pred_check_branch
          %210 = sbr.rel (%p208) target = $region40
        $region39: #{tpu_custom_call.1} parent=31 // pred_region
          %211 = dma.done [#allocation6], 8192
        $region40: #{tpu_custom_call.1} parent=31 // pred_fallthru
          _
        // Predicated region
        $region41: #{tpu_custom_call.1} parent=31 // pred_check
          %p212 = pneg %p102
        $region42: #{tpu_custom_call.1} parent=31 // pred_check_branch
          %214 = sbr.rel (%p212) target = $region44
        $region43: #{tpu_custom_call.1} parent=31 // pred_region
          %215 = dma.done [#allocation6], 64
        $region44: #{tpu_custom_call.1} parent=31 // pred_fallthru
          _
        %s216 = sand.u32 %s47, 1
        %s217 = scalar_lea.sflag [#allocation3], %s216
        %s218 = sand.u32 %s47, 1
        %s219 = smul.addr %s218, 8
        %s220 = scalar_lea.vmem [#allocation2], %s219
        %p221 = pneg %p60
        %p222 = pneg %p57
        %p223 = pneg %p81
        %p224 = pneg %p78
        %p225 = pneg %p102
        %p226 = pneg %p99
        %p227 = pneg %p128
        %p228 = pneg %p125
        %s229 = sand.u32 %s115, 1
        %s230 = scalar_lea.sflag [#allocation4], %s229
        %s231 = sand.u32 %s115, 1
        %s232 = smul.addr %s231, 4
        %s233 = scalar_lea.vmem [#allocation8], %s232
        %s234 = sadd.s32 %s25, %s26
        %p235 = scmp.lt.s32.totalorder %s234, 1
        %s236 = scalar_select %p235, %s234, 1
        %p237 = scmp.eq.s32.totalorder %s26, 0
        // Predicated region
        $region45: #{tpu_custom_call.1} parent=31 // pred_check
          %p238 = pneg %p237
        $region46: #{tpu_custom_call.1} parent=31 // pred_check_branch
          %240 = sbr.rel (%p238) target = $region48
        $region47: #{tpu_custom_call.1} parent=31 // pred_region
          %v241 = vlaneseq
          %vm242 = vcmp.ge.s32.totalorder %v241, 0
          %vm243 = vcmp.lt.s32.totalorder %v241, 512
          %vm244 = vmand %vm242, %vm243
          %245 = vst.msk [vmem:[%s233] sm:$0xf] %vm244, 0.0
        $region48: #{tpu_custom_call.1} parent=31 // pred_fallthru
          _
        %v246 = vld [vmem:[%s203] sm:$0xff]
        %v247 = vld [vmem:[#allocation5] sm:$0xff]
        %v248 = vld [vmem:[#allocation5 + $0x8] sm:$0xff]
        %v249 = vld [vmem:[#allocation5 + $0x10] sm:$0xff]
        %v250 = vld [vmem:[#allocation5 + $0x18] sm:$0xff]
        %v251 = vld [vmem:[#allocation5 + $0x20] sm:$0xff]
        %v252 = vld [vmem:[#allocation5 + $0x28] sm:$0xff]
        %v253 = vld [vmem:[#allocation5 + $0x30] sm:$0xff]
        %v254 = vld [vmem:[#allocation5 + $0x38] sm:$0xff]
        %v255 = vld [vmem:[#allocation5 + $0x40] sm:$0xff]
        %v256 = vld [vmem:[#allocation5 + $0x48] sm:$0xff]
        %v257 = vld [vmem:[#allocation5 + $0x50] sm:$0xff]
        %v258 = vld [vmem:[#allocation5 + $0x58] sm:$0xff]
        %v259 = vld [vmem:[#allocation5 + $0x60] sm:$0xff]
        %v260 = vld [vmem:[#allocation5 + $0x68] sm:$0xff]
        %v261 = vld [vmem:[#allocation5 + $0x70] sm:$0xff]
        %v262 = vld [vmem:[#allocation5 + $0x78] sm:$0xff]
        %v263 = vld [vmem:[#allocation5 + $0x80] sm:$0xff]
        %v264 = vld [vmem:[#allocation5 + $0x88] sm:$0xff]
        %v265 = vld [vmem:[#allocation5 + $0x90] sm:$0xff]
        %v266 = vld [vmem:[#allocation5 + $0x98] sm:$0xff]
        %v267 = vld [vmem:[#allocation5 + $0xa0] sm:$0xff]
        %v268 = vld [vmem:[#allocation5 + $0xa8] sm:$0xff]
        %v269 = vld [vmem:[#allocation5 + $0xb0] sm:$0xff]
        %v270 = vld [vmem:[#allocation5 + $0xb8] sm:$0xff]
        %v271 = vld [vmem:[#allocation5 + $0xc0] sm:$0xff]
        %v272 = vld [vmem:[#allocation5 + $0xc8] sm:$0xff]
        %v273 = vld [vmem:[#allocation5 + $0xd0] sm:$0xff]
        %v274 = vld [vmem:[#allocation5 + $0xd8] sm:$0xff]
        %v275 = vld [vmem:[#allocation5 + $0xe0] sm:$0xff]
        %v276 = vld [vmem:[#allocation5 + $0xe8] sm:$0xff]
        %v277 = vld [vmem:[#allocation5 + $0xf0] sm:$0xff]
        %v278 = vld [vmem:[#allocation5 + $0xf8] sm:$0xff]
        %v279 = vld [vmem:[#allocation5 + $0x100] sm:$0xff]
        %v280 = vld [vmem:[#allocation5 + $0x108] sm:$0xff]
        %v281 = vld [vmem:[#allocation5 + $0x110] sm:$0xff]
        %v282 = vld [vmem:[#allocation5 + $0x118] sm:$0xff]
        %v283 = vld [vmem:[#allocation5 + $0x120] sm:$0xff]
        %v284 = vld [vmem:[#allocation5 + $0x128] sm:$0xff]
        %v285 = vld [vmem:[#allocation5 + $0x130] sm:$0xff]
        %v286 = vld [vmem:[#allocation5 + $0x138] sm:$0xff]
        %v287 = vld [vmem:[#allocation5 + $0x140] sm:$0xff]
        %v288 = vld [vmem:[#allocation5 + $0x148] sm:$0xff]
        %v289 = vld [vmem:[#allocation5 + $0x150] sm:$0xff]
        %v290 = vld [vmem:[#allocation5 + $0x158] sm:$0xff]
        %v291 = vld [vmem:[#allocation5 + $0x160] sm:$0xff]
        %v292 = vld [vmem:[#allocation5 + $0x168] sm:$0xff]
        %v293 = vld [vmem:[#allocation5 + $0x170] sm:$0xff]
        %v294 = vld [vmem:[#allocation5 + $0x178] sm:$0xff]
        %v295 = vld [vmem:[#allocation5 + $0x180] sm:$0xff]
        %v296 = vld [vmem:[#allocation5 + $0x188] sm:$0xff]
        %v297 = vld [vmem:[#allocation5 + $0x190] sm:$0xff]
        %v298 = vld [vmem:[#allocation5 + $0x198] sm:$0xff]
        %v299 = vld [vmem:[#allocation5 + $0x1a0] sm:$0xff]
        %v300 = vld [vmem:[#allocation5 + $0x1a8] sm:$0xff]
        %v301 = vld [vmem:[#allocation5 + $0x1b0] sm:$0xff]
        %v302 = vld [vmem:[#allocation5 + $0x1b8] sm:$0xff]
        %v303 = vld [vmem:[#allocation5 + $0x1c0] sm:$0xff]
        %v304 = vld [vmem:[#allocation5 + $0x1c8] sm:$0xff]
        %v305 = vld [vmem:[#allocation5 + $0x1d0] sm:$0xff]
        %v306 = vld [vmem:[#allocation5 + $0x1d8] sm:$0xff]
        %v307 = vld [vmem:[#allocation5 + $0x1e0] sm:$0xff]
        %v308 = vld [vmem:[#allocation5 + $0x1e8] sm:$0xff]
        %v309 = vld [vmem:[#allocation5 + $0x1f0] sm:$0xff]
        %v310 = vld [vmem:[#allocation5 + $0x1f8] sm:$0xff]
        %v311 = vld [vmem:[#allocation7] sm:$0xf]
        %v313 = vlaneseq
        %v314 = vshrl.u32 %v313, 7
        %v315 = vsub.s32 0, %v314
        %v316 = vrot.slane %v311, %v315
        %v317 = vlaneseq
        %v318 = vshrl.u32 %v317, 7
        %v319 = vsub.s32 1, %v318
        %v320 = vrot.slane %v311, %v319
        %v321 = vlaneseq
        %v322 = vshrl.u32 %v321, 7
        %v323 = vsub.s32 2, %v322
        %v324 = vrot.slane %v311, %v323
        %v325 = vlaneseq
        %v326 = vshrl.u32 %v325, 7
        %v327 = vsub.s32 3, %v326
        %v328 = vrot.slane %v311, %v327
        %333 = vmatprep.subr.mxu0 %v308
        %334 = vmatpush1.msra.mxu0 %v307
        %335 = vmatprep.subr.mxu0 %v304
        %336 = vmatpush1.msra.mxu0 %v303
        %337 = vmatprep.subr.mxu0 %v300
        %338 = vmatpush1.msra.mxu0 %v299
        %339 = vmatprep.subr.mxu0 %v296
        %340 = vmatpush1.msra.mxu0 %v295
        %341 = vmatprep.subr.mxu0 %v292
        %342 = vmatpush1.msra.mxu0 %v291
        %343 = vmatprep.subr.mxu0 %v288
        %344 = vmatpush1.msra.mxu0 %v287
        %345 = vmatprep.subr.mxu0 %v284
        %346 = vmatpush1.msra.mxu0 %v283
        %347 = vmatprep.subr.mxu0 %v280
        %348 = vmatpush1.msra.mxu0 %v279
        %349 = vmatprep.subr.mxu0 %v276
        %350 = vmatpush1.msra.mxu0 %v275
        %351 = vmatprep.subr.mxu0 %v272
        %352 = vmatpush1.msra.mxu0 %v271
        %353 = vmatprep.subr.mxu0 %v268
        %354 = vmatpush1.msra.mxu0 %v267
        %355 = vmatprep.subr.mxu0 %v264
        %356 = vmatpush1.msra.mxu0 %v263
        %357 = vmatprep.subr.mxu0 %v260
        %358 = vmatpush1.msra.mxu0 %v259
        %359 = vmatprep.subr.mxu0 %v256
        %360 = vmatpush1.msra.mxu0 %v255
        %361 = vmatprep.subr.mxu0 %v252
        %362 = vmatpush1.msra.mxu0 %v251
        %363 = vmatprep.subr.mxu0 %v248
        %364 = vmatpush1.msra.mxu0 %v247
        %365 = vmatprep.subr.mxu0 0.0
        %366 = vmatpush2.msra.mxu0 0.0
        %367 = vmatprep.subr.mxu0 0.0
        %368 = vmatpush2.msra.mxu0 0.0
        %369 = vmatprep.subr.mxu0 0.0
        %370 = vmatpush2.msra.mxu0 0.0
        %371 = vmatprep.subr.mxu0 0.0
        %372 = vmatpush2.msra.mxu0 0.0
        %373 = vmatprep.subr.mxu0 0.0
        %374 = vmatpush2.msra.mxu0 0.0
        %375 = vmatprep.subr.mxu0 0.0
        %376 = vmatpush2.msra.mxu0 0.0
        %377 = vmatprep.subr.mxu0 0.0
        %378 = vmatpush2.msra.mxu0 0.0
        %379 = vmatprep.subr.mxu0 0.0
        %380 = vmatpush2.msra.mxu0 0.0
        %381 = vmatprep.subr.mxu0 0.0
        %382 = vmatpush2.msra.mxu0 0.0
        %383 = vmatprep.subr.mxu0 0.0
        %384 = vmatpush2.msra.mxu0 0.0
        %385 = vmatprep.subr.mxu0 0.0
        %386 = vmatpush2.msra.mxu0 0.0
        %387 = vmatprep.subr.mxu0 0.0
        %388 = vmatpush2.msra.mxu0 0.0
        %389 = vmatprep.subr.mxu0 0.0
        %390 = vmatpush2.msra.mxu0 0.0
        %391 = vmatprep.subr.mxu0 0.0
        %392 = vmatpush2.msra.mxu0 0.0
        %393 = vmatprep.subr.mxu0 0.0
        %394 = vmatpush2.msra.mxu0 0.0
        %395 = vmatprep.subr.mxu0 0.0
        %396 = vmatpush2.msra.mxu0 0.0
        %397 = vmatprep.mubr.f32.mxu0 0.0
        %398 = vmatmul.mubr.f32.gmra.mxu0 %v246
        %v399 = vpop.f32.mrf.mxu0
        %v400 = vadd.f32 %v316, %v399
        %v401 = vpop.f32.mrf.mxu0
        %v402 = vadd.f32 %v320, %v401
        %403 = vdwg.mxu0
        %404 = vmatprep.subr.mxu0 %v310
        %405 = vmatpush1.msra.mxu0 %v309
        %406 = vmatprep.subr.mxu0 %v306
        %407 = vmatpush1.msra.mxu0 %v305
        %408 = vmatprep.subr.mxu0 %v302
        %409 = vmatpush1.msra.mxu0 %v301
        %410 = vmatprep.subr.mxu0 %v298
        %411 = vmatpush1.msra.mxu0 %v297
        %412 = vmatprep.subr.mxu0 %v294
        %413 = vmatpush1.msra.mxu0 %v293
        %414 = vmatprep.subr.mxu0 %v290
        %415 = vmatpush1.msra.mxu0 %v289
        %416 = vmatprep.subr.mxu0 %v286
        %417 = vmatpush1.msra.mxu0 %v285
        %418 = vmatprep.subr.mxu0 %v282
        %419 = vmatpush1.msra.mxu0 %v281
        %420 = vmatprep.subr.mxu0 %v278
        %421 = vmatpush1.msra.mxu0 %v277
        %422 = vmatprep.subr.mxu0 %v274
        %423 = vmatpush1.msra.mxu0 %v273
        %424 = vmatprep.subr.mxu0 %v270
        %425 = vmatpush1.msra.mxu0 %v269
        %426 = vmatprep.subr.mxu0 %v266
        %427 = vmatpush1.msra.mxu0 %v265
        %428 = vmatprep.subr.mxu0 %v262
        %429 = vmatpush1.msra.mxu0 %v261
        %430 = vmatprep.subr.mxu0 %v258
        %431 = vmatpush1.msra.mxu0 %v257
        %432 = vmatprep.subr.mxu0 %v254
        %433 = vmatpush1.msra.mxu0 %v253
        %434 = vmatprep.subr.mxu0 %v250
        %435 = vmatpush1.msra.mxu0 %v249
        %436 = vmatprep.subr.mxu0 0.0
        %437 = vmatpush2.msra.mxu0 0.0
        %438 = vmatprep.subr.mxu0 0.0
        %439 = vmatpush2.msra.mxu0 0.0
        %440 = vmatprep.subr.mxu0 0.0
        %441 = vmatpush2.msra.mxu0 0.0
        %442 = vmatprep.subr.mxu0 0.0
        %443 = vmatpush2.msra.mxu0 0.0
        %444 = vmatprep.subr.mxu0 0.0
        %445 = vmatpush2.msra.mxu0 0.0
        %446 = vmatprep.subr.mxu0 0.0
        %447 = vmatpush2.msra.mxu0 0.0
        %448 = vmatprep.subr.mxu0 0.0
        %449 = vmatpush2.msra.mxu0 0.0
        %450 = vmatprep.subr.mxu0 0.0
        %451 = vmatpush2.msra.mxu0 0.0
        %452 = vmatprep.subr.mxu0 0.0
        %453 = vmatpush2.msra.mxu0 0.0
        %454 = vmatprep.subr.mxu0 0.0
        %455 = vmatpush2.msra.mxu0 0.0
        %456 = vmatprep.subr.mxu0 0.0
        %457 = vmatpush2.msra.mxu0 0.0
        %458 = vmatprep.subr.mxu0 0.0
        %459 = vmatpush2.msra.mxu0 0.0
        %460 = vmatprep.subr.mxu0 0.0
        %461 = vmatpush2.msra.mxu0 0.0
        %462 = vmatprep.subr.mxu0 0.0
        %463 = vmatpush2.msra.mxu0 0.0
        %464 = vmatprep.subr.mxu0 0.0
        %465 = vmatpush2.msra.mxu0 0.0
        %466 = vmatprep.subr.mxu0 0.0
        %467 = vmatpush2.msra.mxu0 0.0
        %468 = vmatprep.mubr.f32.mxu0 0.0
        %469 = vmatmul.mubr.f32.gmra.mxu0 %v246
        %v470 = vpop.f32.mrf.mxu0
        %v471 = vadd.f32 %v324, %v470
        %v472 = vpop.f32.mrf.mxu0
        %v473 = vadd.f32 %v328, %v472
        %474 = vdwg.mxu0
        %v475 = vtanh.pop %v400
        %v476 = vtanh.pop %v402
        %v477 = vtanh.pop %v471
        %v478 = vtanh.pop %v473
        %s479 = sadd.s32 %s25, %s26
        %s480 = smul.u32 %s479, 8
        %s481 = sadd.s32 %s480, 8
        %p482 = scmp.gt.s32.totalorder %s481, 16
        %p483 = scmp.le.s32.totalorder %s481, 16
        // Predicated region
        $region49: #{tpu_custom_call.1} parent=31 // pred_check
          %p484 = pneg %p483
        $region50: #{tpu_custom_call.1} parent=31 // pred_check_branch
          %486 = sbr.rel (%p484) target = $region52
        $region51: #{tpu_custom_call.1} parent=31 // pred_region
          %v487 = vld [vmem:[%s233] sm:$0xf]
          %v488 = vrot.slane %v475, 4
          %v489 = vadd.f32 %v475, %v488
          %v490 = vrot.slane %v489, 2
          %v491 = vadd.f32 %v489, %v490
          %v492 = vrot.slane %v491, 1
          %v493 = vadd.f32 %v491, %v492
          %v494 = vrot.slane %v476, 4
          %v495 = vadd.f32 %v476, %v494
          %v496 = vrot.slane %v495, 2
          %v497 = vadd.f32 %v495, %v496
          %v498 = vrot.slane %v497, 1
          %v499 = vadd.f32 %v497, %v498
          %v500 = vrot.slane %v477, 4
          %v501 = vadd.f32 %v477, %v500
          %v502 = vrot.slane %v501, 2
          %v503 = vadd.f32 %v501, %v502
          %v504 = vrot.slane %v503, 1
          %v505 = vadd.f32 %v503, %v504
          %v506 = vrot.slane %v478, 4
          %v507 = vadd.f32 %v478, %v506
          %v508 = vrot.slane %v507, 2
          %v509 = vadd.f32 %v507, %v508
          %v510 = vrot.slane %v509, 1
          %v511 = vadd.f32 %v509, %v510
          %v516 = vcombine.low %v493, %v499
          %v517 = vcombine.low %v505, %v511
          %v519 = vunpack.c.l.s4 1966171168
          %v520 = vunpack.c.0.s8 %v519
          %v521 = vlaneseq
          %v522 = vshrl.u32 %v521, 7
          %v523 = vsub.s32 %v520, %v522
          %v524 = vrot.slane %v516, %v523
          %v526 = vunpack.c.l.s4 1966171168
          %v527 = vunpack.c.0.s8 %v526
          %v528 = vlaneseq
          %v529 = vshrl.u32 %v528, 7
          %v530 = vsub.s32 %v527, %v529
          %v531 = vrot.slane %v517, %v530
          %v532 = vcombine.low %v524, %v531
          %v534 = vunpack.c.l.s4 1966171168
          %v535 = vunpack.c.0.s8 %v534
          %v536 = vlaneseq
          %v537 = vshrl.u32 %v536, 7
          %v538 = vsub.s32 %v535, %v537
          %v539 = vrot.slane %v532, %v538
          %v541 = vadd.f32 %v487, %v539
          %v542 = vlaneseq
          %vm543 = vcmp.ge.s32.totalorder %v542, 0
          %vm544 = vcmp.lt.s32.totalorder %v542, 512
          %vm545 = vmand %vm543, %vm544
          %546 = vst.msk [vmem:[%s233] sm:$0xf] %vm545, %v541
        $region52: #{tpu_custom_call.1} parent=31 // pred_fallthru
          _
        // Predicated region
        $region53: #{tpu_custom_call.1} parent=31 // pred_check
          %p547 = pneg %p482
        $region54: #{tpu_custom_call.1} parent=31 // pred_check_branch
          %549 = sbr.rel (%p547) target = $region56
        $region55: #{tpu_custom_call.1} parent=31 // pred_region
          %v550 = vlaneseq
          %v551 = vshrl.u32 %v550, 7
          %v552 = vstv %s480
          %v553 = vadd.s32 %v552, %v551
          %vm554 = vcmp.lt.s32.totalorder %v553, 16
          %v555 = vsel %vm554, 1, 0
          %vm556 = vcmp.eq.s32.totalorder %v555, 1
          %v557 = vsel %vm556, %v475, 0.0
          %v558 = vsel %vm556, %v476, 0.0
          %v559 = vsel %vm556, %v477, 0.0
          %v560 = vsel %vm556, %v478, 0.0
          %v561 = vld [vmem:[%s233] sm:$0xf]
          %v562 = vrot.slane %v557, 4
          %v563 = vadd.f32 %v557, %v562
          %v564 = vrot.slane %v563, 2
          %v565 = vadd.f32 %v563, %v564
          %v566 = vrot.slane %v565, 1
          %v567 = vadd.f32 %v565, %v566
          %v568 = vrot.slane %v558, 4
          %v569 = vadd.f32 %v558, %v568
          %v570 = vrot.slane %v569, 2
          %v571 = vadd.f32 %v569, %v570
          %v572 = vrot.slane %v571, 1
          %v573 = vadd.f32 %v571, %v572
          %v574 = vrot.slane %v559, 4
          %v575 = vadd.f32 %v559, %v574
          %v576 = vrot.slane %v575, 2
          %v577 = vadd.f32 %v575, %v576
          %v578 = vrot.slane %v577, 1
          %v579 = vadd.f32 %v577, %v578
          %v580 = vrot.slane %v560, 4
          %v581 = vadd.f32 %v560, %v580
          %v582 = vrot.slane %v581, 2
          %v583 = vadd.f32 %v581, %v582
          %v584 = vrot.slane %v583, 1
          %v585 = vadd.f32 %v583, %v584
          %v590 = vcombine.low %v567, %v573
          %v591 = vcombine.low %v579, %v585
          %v593 = vunpack.c.l.s4 1966171168
          %v594 = vunpack.c.0.s8 %v593
          %v595 = vlaneseq
          %v596 = vshrl.u32 %v595, 7
          %v597 = vsub.s32 %v594, %v596
          %v598 = vrot.slane %v590, %v597
          %v600 = vunpack.c.l.s4 1966171168
          %v601 = vunpack.c.0.s8 %v600
          %v602 = vlaneseq
          %v603 = vshrl.u32 %v602, 7
          %v604 = vsub.s32 %v601, %v603
          %v605 = vrot.slane %v591, %v604
          %v606 = vcombine.low %v598, %v605
          %v608 = vunpack.c.l.s4 1966171168
          %v609 = vunpack.c.0.s8 %v608
          %v610 = vlaneseq
          %v611 = vshrl.u32 %v610, 7
          %v612 = vsub.s32 %v609, %v611
          %v613 = vrot.slane %v606, %v612
          %v615 = vadd.f32 %v561, %v613
          %v616 = vlaneseq
          %vm617 = vcmp.ge.s32.totalorder %v616, 0
          %vm618 = vcmp.lt.s32.totalorder %v616, 512
          %vm619 = vmand %vm617, %vm618
          %620 = vst.msk [vmem:[%s233] sm:$0xf] %vm619, %v615
        $region56: #{tpu_custom_call.1} parent=31 // pred_fallthru
          _
        %s621 = sand.u32 %s115, 1
        %s622 = scalar_lea.sflag [#allocation4], %s621
        %s623 = sand.u32 %s115, 1
        %s624 = smul.addr %s623, 4
        %s625 = scalar_lea.vmem [#allocation8], %s624
        // Predicated region
        $region57: #{tpu_custom_call.1} parent=31 // pred_check
          %p626 = pneg %p125
        $region58: #{tpu_custom_call.1} parent=31 // pred_check_branch
          %628 = sbr.rel (%p626) target = $region60
        $region59: #{tpu_custom_call.1} parent=31 // pred_region
          %s630 = ssub.s32 64, 64
          %631 = vsyncadd %s622, %s630
          %s632 = smul.addr %s25, 4
          %s633 = smul.addr %s632, 16
          %s634 = scalar_lea.hbm %s3, %s633
          %s636 = sshll.u32 %s625, 4
          %s637 = int_to_ptr.vmem [resolvable:$true] %s636
          %639 = dma.vmem_to_hbm [thread:$0]  %s637, 64, %s634, %s622
        $region60: #{tpu_custom_call.1} parent=31 // pred_fallthru
          _
      $region32: #{tpu_custom_call.1} parent=5 // pred_fallthru
        _
      %p640 = scmp.le.s32.totalorder 2, %s16
      // Predicated region
      $region61: #{tpu_custom_call.1} parent=5 // pred_check
        %p641 = pneg %p640
      $region62: #{tpu_custom_call.1} parent=5 // pred_check_branch
        %643 = sbr.rel (%p641) target = $region64
      $region63: #{tpu_custom_call.1} parent=5 // pred_region
        %s644 = ssub.s32 %s16, 2
        // Predicated region
        $region65: #{tpu_custom_call.1} parent=63 // pred_check
          %p645 = pneg %p131
        $region66: #{tpu_custom_call.1} parent=63 // pred_check_branch
          %647 = sbr.rel (%p645) target = $region68
        $region67: #{tpu_custom_call.1} parent=63 // pred_region
          %s648 = sand.u32 %s116, 1
          %s649 = scalar_lea.sflag [#allocation4], %s648
          %s650 = sand.u32 %s116, 1
          %s651 = smul.addr %s650, 4
          %s652 = scalar_lea.vmem [#allocation8], %s651
          %653 = dma.done %s649, 64
        $region68: #{tpu_custom_call.1} parent=63 // pred_fallthru
          _
      $region64: #{tpu_custom_call.1} parent=5 // pred_fallthru
        _
    $region6: #{tpu_custom_call.1} parent=1 // loop_footer
      %s20 = sadd.s32 1, %s16
    $region7: #{tpu_custom_call.1} parent=1 // loop_footer_branch
      %15 = sbr.rel target = $region3
    $region8: #{tpu_custom_call.1} parent=1 // loop_exit
      _
    %654 = vsyncpa [#allocation3], 1
    %s655 = scalar_lea.sflag [#allocation3], 1
    %656 = vsyncpa %s655, 1
    %657 = vsyncpa [#allocation6], 1
    %658 = vsyncpa [#allocation4], 1
    %s659 = scalar_lea.sflag [#allocation4], 1
    %660 = vsyncpa %s659, 1

</llo_original>
